<compile_context>
chip_gen: v7x
topology: tpu7x:2x2x1
jax: 0.10.0
libtpu: 0.0.40
codegen_flags: <defaults>
</compile_context>

<pallas_src>
import jax
import jax.numpy as jnp
from jax import lax
from jax.experimental import pallas as pl
from jax.experimental.pallas import tpu as pltpu

N = 3          # logical matrix size (torch.mm on 3x3)
ROWS_PAD = 8   # sublane-padded row count for x1 / inp / v1 / v3 / output
LANES = 128    # lane-padded column count
THRESH = 0.35


def _model_kernel(x2_ref, x1_ref, inp_ref, o_ref, rhs_ref):
    # x2_ref: (9,) f32 in SMEM (scalar prefetch) -- the flat boolean-mask source
    # x1_ref/inp_ref: (8,128) VMEM, logical data in [0:3, 0:3]
    # rhs_ref: (128,128) VMEM scratch reused as the K=128 RHS of both matmuls
    x1 = x1_ref[...]                                                     # (8,128)

    # Matmul #1 RHS: zero-fill the scratch (stale VMEM may hold NaN and
    # 0*NaN = NaN), then place inp in the top 8 rows.
    rhs_ref[...] = jnp.zeros_like(rhs_ref)
    rhs_ref[pl.ds(0, ROWS_PAD), :] = inp_ref[...]
    v1 = jnp.dot(x1, rhs_ref[...], preferred_element_type=jnp.float32)   # torch.mm(x1, inp)
    v2 = v1 + x1                                                         # v1 + x1

    # Matmul #2 reuses the same scratch: rows 8..127 are still zero, only the
    # top 8 rows are overwritten with v2.
    rhs_ref[pl.ds(0, ROWS_PAD), :] = v2
    v3 = jnp.dot(v2, rhs_ref[...], preferred_element_type=jnp.float32)   # torch.mm(v2, v2)

    # Boolean-mask gather v3[x2 > 0.35], fully in-kernel, flat row-major order
    # (matches torch).  Unrolled scalar scan over the 9 positions: a scalar
    # compare from SMEM decides selection, a lane-masked reduce on the
    # statically-sliced row fetches v3[r, c], and the value is placed at the
    # lane given by the running selected-count.
    lane_row = lax.broadcasted_iota(jnp.int32, (1, LANES), 1)
    sel = jnp.zeros((1, LANES), jnp.float32)
    count = jnp.int32(0)
    for p in range(N * N):                       # 9 positions, fully unrolled
        r, c = p // N, p % N
        is_sel = x2_ref[p] > THRESH                              # scalar bool
        val = jnp.sum(jnp.where(lane_row == c, v3[r:r + 1, :], 0.0),
                      axis=1, keepdims=True)                     # (1,1)
        sel = jnp.where((lane_row == count) & is_sel, val, sel)
        count = count + is_sel.astype(jnp.int32)

    o_ref[...] = v1 + sel                        # broadcast v3_select over rows


def _model_forward_impl(x1, x2, inp):
    # v3[x2 > 0.35] has a data-dependent output shape; the PyTorch forward only
    # type-checks when exactly N (=3) elements are selected, so that invariant
    # is assumed.
    # TODO(synk): general data-dependent-shape boolean masking has no static
    #             Pallas equivalent; if the true count != 3 this silently
    #             differs where PyTorch would raise a broadcast error.
    x1_pad = jnp.pad(x1.astype(jnp.float32), ((0, ROWS_PAD - N), (0, LANES - N)))
    inp_pad = jnp.pad(inp.astype(jnp.float32), ((0, ROWS_PAD - N), (0, LANES - N)))
    x2_flat = x2.astype(jnp.float32).ravel()     # row-major, matches torch order

    out = pl.pallas_call(
        _model_kernel,
        out_shape=jax.ShapeDtypeStruct((ROWS_PAD, LANES), jnp.float32),
        grid_spec=pltpu.PrefetchScalarGridSpec(
            num_scalar_prefetch=1,
            grid=(1,),
            in_specs=[
                pl.BlockSpec((ROWS_PAD, LANES), lambda i, x2f: (0, 0)),
                pl.BlockSpec((ROWS_PAD, LANES), lambda i, x2f: (0, 0)),
            ],
            out_specs=pl.BlockSpec((ROWS_PAD, LANES), lambda i, x2f: (0, 0)),
            scratch_shapes=[pltpu.VMEM((LANES, LANES), jnp.float32)],
        ),
        compiler_params=pltpu.CompilerParams(dimension_semantics=("arbitrary",)),
    )(x2_flat, x1_pad, inp_pad)
    return out[:N, :N]


model_forward = jax.jit(_model_forward_impl)


if __name__ == "__main__":
    key = jax.random.PRNGKey(0)
    k1, k2, k3 = jax.random.split(key, 3)
    x1 = jax.random.normal(k1, (N, N), jnp.float32)
    inp = jax.random.normal(k3, (N, N), jnp.float32)

    # x2 must have exactly N elements > 0.35 for the original PyTorch broadcast
    # to be valid; build it deterministically from PRNG draws with that property.
    raw = jax.random.normal(k2, (N, N), jnp.float32)
    order = jnp.argsort(-raw.ravel())
    top_mask = jnp.zeros(N * N, bool).at[order[:N]].set(True).reshape(N, N)
    x2 = jnp.where(top_mask, jnp.abs(raw) + 0.4, -jnp.abs(raw) - 0.4)

    out = model_forward(x1, x2, inp)
    jax.block_until_ready(out)

    # Pure-JAX reference check of the exact PyTorch semantics.
    v1 = x1 @ inp
    v2 = v1 + x1
    v3 = v2 @ v2
    v3_sel = v3.ravel()[jnp.nonzero((x2 > 0.35).ravel(), size=N)[0]]
    ref = v1 + v3_sel[None, :]
    assert jnp.allclose(out, ref, atol=1e-4, rtol=1e-4), (out, ref)

    print("KERNEL_OK")
</pallas_src>

<mosaic_0001>
module attributes {stable_mosaic.version = 11 : i64} {
  func.func @_model_kernel(%arg0: i32, %arg1: memref<9xf32, #tpu.memory_space<smem>>, %arg2: memref<8x128xf32, #tpu.memory_space<vmem>>, %arg3: memref<8x128xf32, #tpu.memory_space<vmem>>, %arg4: memref<8x128xf32, #tpu.memory_space<vmem>>, %arg5: memref<128x128xf32, #tpu.memory_space<vmem>>) attributes {dimension_semantics = [#tpu.dimension_semantics<arbitrary>], iteration_bounds = array<i64: 1>, scalar_prefetch = 1 : i64, scratch_operands = 1 : i64, tpu.core_type = #tpu.core_type<tc>, window_params = [{pipeline_mode = #tpu.pipeline_mode<synchronous>, transform_indices = @transform_0, window_bounds = array<i64: 8, 128>}, {pipeline_mode = #tpu.pipeline_mode<synchronous>, transform_indices = @transform_1, window_bounds = array<i64: 8, 128>}, {pipeline_mode = #tpu.pipeline_mode<synchronous>, transform_indices = @transform_2, window_bounds = array<i64: 8, 128>}]} {
    %c0 = arith.constant 0 : index
    %c0_0 = arith.constant 0 : index
    %0 = vector.load %arg2[%c0, %c0_0] : memref<8x128xf32, #tpu.memory_space<vmem>>, vector<8x128xf32>
    %cst = arith.constant 0.000000e+00 : f32
    %1 = vector.broadcast %cst : f32 to vector<128x128xf32>
    %c0_1 = arith.constant 0 : index
    %c0_2 = arith.constant 0 : index
    %2 = vector.load %arg5[%c0_1, %c0_2] : memref<128x128xf32, #tpu.memory_space<vmem>>, vector<128x128xf32>
    tpu.vector_store %arg5[%c0_1, %c0_2], %1 {strides = array<i32>} : memref<128x128xf32, #tpu.memory_space<vmem>>, vector<128x128xf32>,
    %c0_3 = arith.constant 0 : index
    %c0_4 = arith.constant 0 : index
    %3 = vector.load %arg3[%c0_3, %c0_4] : memref<8x128xf32, #tpu.memory_space<vmem>>, vector<8x128xf32>
    %c0_5 = arith.constant 0 : index
    %c0_6 = arith.constant 0 : index
    %4 = vector.load %arg5[%c0_5, %c0_6] : memref<128x128xf32, #tpu.memory_space<vmem>>, vector<8x128xf32>
    tpu.vector_store %arg5[%c0_5, %c0_6], %3 {strides = array<i32>} : memref<128x128xf32, #tpu.memory_space<vmem>>, vector<8x128xf32>,
    %c0_7 = arith.constant 0 : index
    %c0_8 = arith.constant 0 : index
    %5 = vector.load %arg5[%c0_7, %c0_8] : memref<128x128xf32, #tpu.memory_space<vmem>>, vector<128x128xf32>
    %cst_9 = arith.constant dense<0.000000e+00> : vector<8x128xf32>
    %6 = tpu.matmul %0, %5, %cst_9 {dimension_numbers = #tpu.dot_dimension_numbers<[1], [0], [0], [1], [0, 0, 1, 1], [], []>} : vector<8x128xf32>, vector<128x128xf32>, vector<8x128xf32> -> vector<8x128xf32>
    %7 = arith.addf %6, %0 : vector<8x128xf32>
    %c0_10 = arith.constant 0 : index
    %c0_11 = arith.constant 0 : index
    %8 = vector.load %arg5[%c0_10, %c0_11] : memref<128x128xf32, #tpu.memory_space<vmem>>, vector<8x128xf32>
    tpu.vector_store %arg5[%c0_10, %c0_11], %7 {strides = array<i32>} : memref<128x128xf32, #tpu.memory_space<vmem>>, vector<8x128xf32>,
    %c0_12 = arith.constant 0 : index
    %c0_13 = arith.constant 0 : index
    %9 = vector.load %arg5[%c0_12, %c0_13] : memref<128x128xf32, #tpu.memory_space<vmem>>, vector<128x128xf32>
    %cst_14 = arith.constant dense<0.000000e+00> : vector<8x128xf32>
    %10 = tpu.matmul %7, %9, %cst_14 {dimension_numbers = #tpu.dot_dimension_numbers<[1], [0], [0], [1], [0, 0, 1, 1], [], []>} : vector<8x128xf32>, vector<128x128xf32>, vector<8x128xf32> -> vector<8x128xf32>
    %11 = tpu.iota {dimensions = array<i32: 1>} : vector<1x128xi32>
    %cst_15 = arith.constant 0.000000e+00 : f32
    %12 = vector.broadcast %cst_15 : f32 to vector<1x128xf32>
    %c0_16 = arith.constant 0 : index
    %13 = memref.load %arg1[%c0_16] : memref<9xf32, #tpu.memory_space<smem>>
    %cst_17 = arith.constant 3.500000e-01 : f32
    %14 = arith.cmpf ogt, %13, %cst_17 : f32
    %c0_i32 = arith.constant 0 : i32
    %15 = vector.broadcast %c0_i32 : i32 to vector<1x128xi32>
    %16 = arith.cmpi eq, %11, %15 : vector<1x128xi32>
    %17 = vector.extract_strided_slice %10 {offsets = [0, 0], sizes = [1, 128], strides = [1, 1]} : vector<8x128xf32> to vector<1x128xf32>
    %cst_18 = arith.constant 0.000000e+00 : f32
    %18 = vector.broadcast %cst_18 : f32 to vector<1x128xf32>
    %19 = arith.select %16, %17, %18 : vector<1x128xi1>, vector<1x128xf32>
    %cst_19 = arith.constant dense<0.000000e+00> : vector<1xf32>
    %20 = vector.multi_reduction <add>, %19, %cst_19 [1] : vector<1x128xf32> to vector<1xf32>
    %21 = vector.shape_cast %20 : vector<1xf32> to vector<1x1xf32>
    %c0_i32_20 = arith.constant 0 : i32
    %22 = vector.broadcast %c0_i32_20 : i32 to vector<1x128xi32>
    %23 = arith.cmpi eq, %11, %22 : vector<1x128xi32>
    %24 = vector.broadcast %14 : i1 to vector<1x128xi1>
    %25 = arith.andi %23, %24 : vector<1x128xi1>
    %26 = vector.shape_cast %21 : vector<1x1xf32> to vector<1x1xf32>
    %27 = vector.broadcast %26 : vector<1x1xf32> to vector<1x128xf32>
    %28 = arith.select %25, %27, %12 : vector<1x128xi1>, vector<1x128xf32>
    %29 = arith.extui %14 : i1 to i32
    %c0_i32_21 = arith.constant 0 : i32
    %30 = arith.addi %c0_i32_21, %29 : i32
    %c1 = arith.constant 1 : index
    %31 = memref.load %arg1[%c1] : memref<9xf32, #tpu.memory_space<smem>>
    %cst_22 = arith.constant 3.500000e-01 : f32
    %32 = arith.cmpf ogt, %31, %cst_22 : f32
    %c1_i32 = arith.constant 1 : i32
    %33 = vector.broadcast %c1_i32 : i32 to vector<1x128xi32>
    %34 = arith.cmpi eq, %11, %33 : vector<1x128xi32>
    %35 = vector.extract_strided_slice %10 {offsets = [0, 0], sizes = [1, 128], strides = [1, 1]} : vector<8x128xf32> to vector<1x128xf32>
    %cst_23 = arith.constant 0.000000e+00 : f32
    %36 = vector.broadcast %cst_23 : f32 to vector<1x128xf32>
    %37 = arith.select %34, %35, %36 : vector<1x128xi1>, vector<1x128xf32>
    %cst_24 = arith.constant dense<0.000000e+00> : vector<1xf32>
    %38 = vector.multi_reduction <add>, %37, %cst_24 [1] : vector<1x128xf32> to vector<1xf32>
    %39 = vector.shape_cast %38 : vector<1xf32> to vector<1x1xf32>
    %40 = vector.broadcast %30 : i32 to vector<1x128xi32>
    %41 = arith.cmpi eq, %11, %40 : vector<1x128xi32>
    %42 = vector.broadcast %32 : i1 to vector<1x128xi1>
    %43 = arith.andi %41, %42 : vector<1x128xi1>
    %44 = vector.shape_cast %39 : vector<1x1xf32> to vector<1x1xf32>
    %45 = vector.broadcast %44 : vector<1x1xf32> to vector<1x128xf32>
    %46 = arith.select %43, %45, %28 : vector<1x128xi1>, vector<1x128xf32>
    %47 = arith.extui %32 : i1 to i32
    %48 = arith.addi %30, %47 : i32
    %c2 = arith.constant 2 : index
    %49 = memref.load %arg1[%c2] : memref<9xf32, #tpu.memory_space<smem>>
    %cst_25 = arith.constant 3.500000e-01 : f32
    %50 = arith.cmpf ogt, %49, %cst_25 : f32
    %c2_i32 = arith.constant 2 : i32
    %51 = vector.broadcast %c2_i32 : i32 to vector<1x128xi32>
    %52 = arith.cmpi eq, %11, %51 : vector<1x128xi32>
    %53 = vector.extract_strided_slice %10 {offsets = [0, 0], sizes = [1, 128], strides = [1, 1]} : vector<8x128xf32> to vector<1x128xf32>
    %cst_26 = arith.constant 0.000000e+00 : f32
    %54 = vector.broadcast %cst_26 : f32 to vector<1x128xf32>
    %55 = arith.select %52, %53, %54 : vector<1x128xi1>, vector<1x128xf32>
    %cst_27 = arith.constant dense<0.000000e+00> : vector<1xf32>
    %56 = vector.multi_reduction <add>, %55, %cst_27 [1] : vector<1x128xf32> to vector<1xf32>
    %57 = vector.shape_cast %56 : vector<1xf32> to vector<1x1xf32>
    %58 = vector.broadcast %48 : i32 to vector<1x128xi32>
    %59 = arith.cmpi eq, %11, %58 : vector<1x128xi32>
    %60 = vector.broadcast %50 : i1 to vector<1x128xi1>
    %61 = arith.andi %59, %60 : vector<1x128xi1>
    %62 = vector.shape_cast %57 : vector<1x1xf32> to vector<1x1xf32>
    %63 = vector.broadcast %62 : vector<1x1xf32> to vector<1x128xf32>
    %64 = arith.select %61, %63, %46 : vector<1x128xi1>, vector<1x128xf32>
    %65 = arith.extui %50 : i1 to i32
    %66 = arith.addi %48, %65 : i32
    %c3 = arith.constant 3 : index
    %67 = memref.load %arg1[%c3] : memref<9xf32, #tpu.memory_space<smem>>
    %cst_28 = arith.constant 3.500000e-01 : f32
    %68 = arith.cmpf ogt, %67, %cst_28 : f32
    %c0_i32_29 = arith.constant 0 : i32
    %69 = vector.broadcast %c0_i32_29 : i32 to vector<1x128xi32>
    %70 = arith.cmpi eq, %11, %69 : vector<1x128xi32>
    %71 = vector.extract_strided_slice %10 {offsets = [1, 0], sizes = [1, 128], strides = [1, 1]} : vector<8x128xf32> to vector<1x128xf32>
    %cst_30 = arith.constant 0.000000e+00 : f32
    %72 = vector.broadcast %cst_30 : f32 to vector<1x128xf32>
    %73 = arith.select %70, %71, %72 : vector<1x128xi1>, vector<1x128xf32>
    %cst_31 = arith.constant dense<0.000000e+00> : vector<1xf32>
    %74 = vector.multi_reduction <add>, %73, %cst_31 [1] : vector<1x128xf32> to vector<1xf32>
    %75 = vector.shape_cast %74 : vector<1xf32> to vector<1x1xf32>
    %76 = vector.broadcast %66 : i32 to vector<1x128xi32>
    %77 = arith.cmpi eq, %11, %76 : vector<1x128xi32>
    %78 = vector.broadcast %68 : i1 to vector<1x128xi1>
    %79 = arith.andi %77, %78 : vector<1x128xi1>
    %80 = vector.shape_cast %75 : vector<1x1xf32> to vector<1x1xf32>
    %81 = vector.broadcast %80 : vector<1x1xf32> to vector<1x128xf32>
    %82 = arith.select %79, %81, %64 : vector<1x128xi1>, vector<1x128xf32>
    %83 = arith.extui %68 : i1 to i32
    %84 = arith.addi %66, %83 : i32
    %c4 = arith.constant 4 : index
    %85 = memref.load %arg1[%c4] : memref<9xf32, #tpu.memory_space<smem>>
    %cst_32 = arith.constant 3.500000e-01 : f32
    %86 = arith.cmpf ogt, %85, %cst_32 : f32
    %c1_i32_33 = arith.constant 1 : i32
    %87 = vector.broadcast %c1_i32_33 : i32 to vector<1x128xi32>
    %88 = arith.cmpi eq, %11, %87 : vector<1x128xi32>
    %89 = vector.extract_strided_slice %10 {offsets = [1, 0], sizes = [1, 128], strides = [1, 1]} : vector<8x128xf32> to vector<1x128xf32>
    %cst_34 = arith.constant 0.000000e+00 : f32
    %90 = vector.broadcast %cst_34 : f32 to vector<1x128xf32>
    %91 = arith.select %88, %89, %90 : vector<1x128xi1>, vector<1x128xf32>
    %cst_35 = arith.constant dense<0.000000e+00> : vector<1xf32>
    %92 = vector.multi_reduction <add>, %91, %cst_35 [1] : vector<1x128xf32> to vector<1xf32>
    %93 = vector.shape_cast %92 : vector<1xf32> to vector<1x1xf32>
    %94 = vector.broadcast %84 : i32 to vector<1x128xi32>
    %95 = arith.cmpi eq, %11, %94 : vector<1x128xi32>
    %96 = vector.broadcast %86 : i1 to vector<1x128xi1>
    %97 = arith.andi %95, %96 : vector<1x128xi1>
    %98 = vector.shape_cast %93 : vector<1x1xf32> to vector<1x1xf32>
    %99 = vector.broadcast %98 : vector<1x1xf32> to vector<1x128xf32>
    %100 = arith.select %97, %99, %82 : vector<1x128xi1>, vector<1x128xf32>
    %101 = arith.extui %86 : i1 to i32
    %102 = arith.addi %84, %101 : i32
    %c5 = arith.constant 5 : index
    %103 = memref.load %arg1[%c5] : memref<9xf32, #tpu.memory_space<smem>>
    %cst_36 = arith.constant 3.500000e-01 : f32
    %104 = arith.cmpf ogt, %103, %cst_36 : f32
    %c2_i32_37 = arith.constant 2 : i32
    %105 = vector.broadcast %c2_i32_37 : i32 to vector<1x128xi32>
    %106 = arith.cmpi eq, %11, %105 : vector<1x128xi32>
    %107 = vector.extract_strided_slice %10 {offsets = [1, 0], sizes = [1, 128], strides = [1, 1]} : vector<8x128xf32> to vector<1x128xf32>
    %cst_38 = arith.constant 0.000000e+00 : f32
    %108 = vector.broadcast %cst_38 : f32 to vector<1x128xf32>
    %109 = arith.select %106, %107, %108 : vector<1x128xi1>, vector<1x128xf32>
    %cst_39 = arith.constant dense<0.000000e+00> : vector<1xf32>
    %110 = vector.multi_reduction <add>, %109, %cst_39 [1] : vector<1x128xf32> to vector<1xf32>
    %111 = vector.shape_cast %110 : vector<1xf32> to vector<1x1xf32>
    %112 = vector.broadcast %102 : i32 to vector<1x128xi32>
    %113 = arith.cmpi eq, %11, %112 : vector<1x128xi32>
    %114 = vector.broadcast %104 : i1 to vector<1x128xi1>
    %115 = arith.andi %113, %114 : vector<1x128xi1>
    %116 = vector.shape_cast %111 : vector<1x1xf32> to vector<1x1xf32>
    %117 = vector.broadcast %116 : vector<1x1xf32> to vector<1x128xf32>
    %118 = arith.select %115, %117, %100 : vector<1x128xi1>, vector<1x128xf32>
    %119 = arith.extui %104 : i1 to i32
    %120 = arith.addi %102, %119 : i32
    %c6 = arith.constant 6 : index
    %121 = memref.load %arg1[%c6] : memref<9xf32, #tpu.memory_space<smem>>
    %cst_40 = arith.constant 3.500000e-01 : f32
    %122 = arith.cmpf ogt, %121, %cst_40 : f32
    %c0_i32_41 = arith.constant 0 : i32
    %123 = vector.broadcast %c0_i32_41 : i32 to vector<1x128xi32>
    %124 = arith.cmpi eq, %11, %123 : vector<1x128xi32>
    %125 = vector.extract_strided_slice %10 {offsets = [2, 0], sizes = [1, 128], strides = [1, 1]} : vector<8x128xf32> to vector<1x128xf32>
    %cst_42 = arith.constant 0.000000e+00 : f32
    %126 = vector.broadcast %cst_42 : f32 to vector<1x128xf32>
    %127 = arith.select %124, %125, %126 : vector<1x128xi1>, vector<1x128xf32>
    %cst_43 = arith.constant dense<0.000000e+00> : vector<1xf32>
    %128 = vector.multi_reduction <add>, %127, %cst_43 [1] : vector<1x128xf32> to vector<1xf32>
    %129 = vector.shape_cast %128 : vector<1xf32> to vector<1x1xf32>
    %130 = vector.broadcast %120 : i32 to vector<1x128xi32>
    %131 = arith.cmpi eq, %11, %130 : vector<1x128xi32>
    %132 = vector.broadcast %122 : i1 to vector<1x128xi1>
    %133 = arith.andi %131, %132 : vector<1x128xi1>
    %134 = vector.shape_cast %129 : vector<1x1xf32> to vector<1x1xf32>
    %135 = vector.broadcast %134 : vector<1x1xf32> to vector<1x128xf32>
    %136 = arith.select %133, %135, %118 : vector<1x128xi1>, vector<1x128xf32>
    %137 = arith.extui %122 : i1 to i32
    %138 = arith.addi %120, %137 : i32
    %c7 = arith.constant 7 : index
    %139 = memref.load %arg1[%c7] : memref<9xf32, #tpu.memory_space<smem>>
    %cst_44 = arith.constant 3.500000e-01 : f32
    %140 = arith.cmpf ogt, %139, %cst_44 : f32
    %c1_i32_45 = arith.constant 1 : i32
    %141 = vector.broadcast %c1_i32_45 : i32 to vector<1x128xi32>
    %142 = arith.cmpi eq, %11, %141 : vector<1x128xi32>
    %143 = vector.extract_strided_slice %10 {offsets = [2, 0], sizes = [1, 128], strides = [1, 1]} : vector<8x128xf32> to vector<1x128xf32>
    %cst_46 = arith.constant 0.000000e+00 : f32
    %144 = vector.broadcast %cst_46 : f32 to vector<1x128xf32>
    %145 = arith.select %142, %143, %144 : vector<1x128xi1>, vector<1x128xf32>
    %cst_47 = arith.constant dense<0.000000e+00> : vector<1xf32>
    %146 = vector.multi_reduction <add>, %145, %cst_47 [1] : vector<1x128xf32> to vector<1xf32>
    %147 = vector.shape_cast %146 : vector<1xf32> to vector<1x1xf32>
    %148 = vector.broadcast %138 : i32 to vector<1x128xi32>
    %149 = arith.cmpi eq, %11, %148 : vector<1x128xi32>
    %150 = vector.broadcast %140 : i1 to vector<1x128xi1>
    %151 = arith.andi %149, %150 : vector<1x128xi1>
    %152 = vector.shape_cast %147 : vector<1x1xf32> to vector<1x1xf32>
    %153 = vector.broadcast %152 : vector<1x1xf32> to vector<1x128xf32>
    %154 = arith.select %151, %153, %136 : vector<1x128xi1>, vector<1x128xf32>
    %155 = arith.extui %140 : i1 to i32
    %156 = arith.addi %138, %155 : i32
    %c8 = arith.constant 8 : index
    %157 = memref.load %arg1[%c8] : memref<9xf32, #tpu.memory_space<smem>>
    %cst_48 = arith.constant 3.500000e-01 : f32
    %158 = arith.cmpf ogt, %157, %cst_48 : f32
    %c2_i32_49 = arith.constant 2 : i32
    %159 = vector.broadcast %c2_i32_49 : i32 to vector<1x128xi32>
    %160 = arith.cmpi eq, %11, %159 : vector<1x128xi32>
    %161 = vector.extract_strided_slice %10 {offsets = [2, 0], sizes = [1, 128], strides = [1, 1]} : vector<8x128xf32> to vector<1x128xf32>
    %cst_50 = arith.constant 0.000000e+00 : f32
    %162 = vector.broadcast %cst_50 : f32 to vector<1x128xf32>
    %163 = arith.select %160, %161, %162 : vector<1x128xi1>, vector<1x128xf32>
    %cst_51 = arith.constant dense<0.000000e+00> : vector<1xf32>
    %164 = vector.multi_reduction <add>, %163, %cst_51 [1] : vector<1x128xf32> to vector<1xf32>
    %165 = vector.shape_cast %164 : vector<1xf32> to vector<1x1xf32>
    %166 = vector.broadcast %156 : i32 to vector<1x128xi32>
    %167 = arith.cmpi eq, %11, %166 : vector<1x128xi32>
    %168 = vector.broadcast %158 : i1 to vector<1x128xi1>
    %169 = arith.andi %167, %168 : vector<1x128xi1>
    %170 = vector.shape_cast %165 : vector<1x1xf32> to vector<1x1xf32>
    %171 = vector.broadcast %170 : vector<1x1xf32> to vector<1x128xf32>
    %172 = arith.select %169, %171, %154 : vector<1x128xi1>, vector<1x128xf32>
    %173 = vector.broadcast %172 : vector<1x128xf32> to vector<8x128xf32>
    %174 = arith.addf %6, %173 : vector<8x128xf32>
    %c0_52 = arith.constant 0 : index
    %c0_53 = arith.constant 0 : index
    %175 = vector.load %arg4[%c0_52, %c0_53] : memref<8x128xf32, #tpu.memory_space<vmem>>, vector<8x128xf32>
    tpu.vector_store %arg4[%c0_52, %c0_53], %174 {strides = array<i32>} : memref<8x128xf32, #tpu.memory_space<vmem>>, vector<8x128xf32>,
    return
  }
  func.func @transform_0(%arg0: i32, %arg1: memref<9xf32, #tpu.memory_space<smem>>) -> (i32, i32) {
    %c0_i32 = arith.constant 0 : i32
    %c0_i32_0 = arith.constant 0 : i32
    %c0_i32_1 = arith.constant 0 : i32
    return %c0_i32, %c0_i32_0 : i32, i32
  }
  func.func @transform_1(%arg0: i32, %arg1: memref<9xf32, #tpu.memory_space<smem>>) -> (i32, i32) {
    %c0_i32 = arith.constant 0 : i32
    %c0_i32_0 = arith.constant 0 : i32
    %c0_i32_1 = arith.constant 0 : i32
    return %c0_i32, %c0_i32_0 : i32, i32
  }
  func.func @transform_2(%arg0: i32, %arg1: memref<9xf32, #tpu.memory_space<smem>>) -> (i32, i32) {
    %c0_i32 = arith.constant 0 : i32
    %c0_i32_0 = arith.constant 0 : i32
    %c0_i32_1 = arith.constant 0 : i32
    return %c0_i32, %c0_i32_0 : i32, i32
  }
}

</mosaic_0001>

<llo_original>
// kernel: _model_forward_impl.1
$region0: #{_model_forward_impl.1}
  #allocation0 [shape = 'u32[]', space=smem, size = 0x4, offset = 0x4, fixed_abs, tag = 'smem constant byte address 0x4 - core index']
  #allocation1 [shape = 'u32[144,128]{1,0:T(1,128)}', space=vmem, size = 0x12000, scoped, tag = 'internal scratch']
  #allocation2 [shape = 'f32[128,128]{1,0:T(8,128)}', space=vmem, size = 0x10000, scoped, tag = 'scratch operand']
  #allocation3 [shape = 's32[1]{0}', space=sflag, size = 0x4, scoped, tag = 'scoped memory for _model_forward_impl.1']
  #allocation4 [shape = 'u8[512]{0}', space=smem, size = 0x200, scoped, tag = 'prefetched SMEM operand 0']
  %s0 = inlined_call_operand.vmem [shape: f32[9], index: 0, kind: input, shape index: {}]
  %s1 = inlined_call_operand.vmem [shape: f32[8,128], index: 1, kind: input, shape index: {}]
  %s2 = inlined_call_operand.vmem [shape: f32[8,128], index: 2, kind: input, shape index: {}]
  %s3 = inlined_call_operand.vmem [shape: f32[8,128], index: 3, kind: output, shape index: {}]
  %s4 = sld [smem:[#allocation0]]
  $region18: #{_model_forward_impl.1} parent=0
    _
  %s6 = ssub.s32 1, %s4
  %s7 = scalar_select 0, %s6, %s4
  %s8 = sshll.u32 %s0, 4
  %s9 = int_to_ptr.vmem [resolvable:$true] %s8
  %11 = dma.vmem_to_smem %s9, 16, [#allocation4], [#allocation3]
  %12 = dma.done [#allocation3], 16
  %13 = sfence
  // Predicated region
  $region2: #{_model_forward_impl.1} parent=0 // pred_check
    _
  $region3: #{_model_forward_impl.1} parent=0 // pred_check_branch
    %15 = sbr.rel (0) target = $region5
  $region4: #{_model_forward_impl.1} parent=0 // pred_region
    _
  $region5: #{_model_forward_impl.1} parent=0 // pred_fallthru
    _
  // Predicated region
  $region6: #{_model_forward_impl.1} parent=0 // pred_check
    _
  $region7: #{_model_forward_impl.1} parent=0 // pred_check_branch
    %17 = sbr.rel (0) target = $region9
  $region8: #{_model_forward_impl.1} parent=0 // pred_region
    _
  $region9: #{_model_forward_impl.1} parent=0 // pred_fallthru
    _
  %v18 = vld [vmem:[%s1] sm:$0xff]
  %19 = vst [vmem:[#allocation2] sm:$0xff] 0.0
  %20 = vst [vmem:[#allocation2 + $0x8] sm:$0xff] 0.0
  %21 = vst [vmem:[#allocation2 + $0x10] sm:$0xff] 0.0
  %22 = vst [vmem:[#allocation2 + $0x18] sm:$0xff] 0.0
  %23 = vst [vmem:[#allocation2 + $0x20] sm:$0xff] 0.0
  %24 = vst [vmem:[#allocation2 + $0x28] sm:$0xff] 0.0
  %25 = vst [vmem:[#allocation2 + $0x30] sm:$0xff] 0.0
  %26 = vst [vmem:[#allocation2 + $0x38] sm:$0xff] 0.0
  %27 = vst [vmem:[#allocation2 + $0x40] sm:$0xff] 0.0
  %28 = vst [vmem:[#allocation2 + $0x48] sm:$0xff] 0.0
  %29 = vst [vmem:[#allocation2 + $0x50] sm:$0xff] 0.0
  %30 = vst [vmem:[#allocation2 + $0x58] sm:$0xff] 0.0
  %31 = vst [vmem:[#allocation2 + $0x60] sm:$0xff] 0.0
  %32 = vst [vmem:[#allocation2 + $0x68] sm:$0xff] 0.0
  %33 = vst [vmem:[#allocation2 + $0x70] sm:$0xff] 0.0
  %34 = vst [vmem:[#allocation2 + $0x78] sm:$0xff] 0.0
  %v35 = vld [vmem:[%s2] sm:$0xff]
  %36 = vst [vmem:[#allocation2] sm:$0xff] %v35
  %v37 = vld [vmem:[#allocation2] sm:$0xff]
  %v38 = vld [vmem:[#allocation2 + $0x8] sm:$0xff]
  %v39 = vld [vmem:[#allocation2 + $0x10] sm:$0xff]
  %v40 = vld [vmem:[#allocation2 + $0x18] sm:$0xff]
  %v41 = vld [vmem:[#allocation2 + $0x20] sm:$0xff]
  %v42 = vld [vmem:[#allocation2 + $0x28] sm:$0xff]
  %v43 = vld [vmem:[#allocation2 + $0x30] sm:$0xff]
  %v44 = vld [vmem:[#allocation2 + $0x38] sm:$0xff]
  %v45 = vld [vmem:[#allocation2 + $0x40] sm:$0xff]
  %v46 = vld [vmem:[#allocation2 + $0x48] sm:$0xff]
  %v47 = vld [vmem:[#allocation2 + $0x50] sm:$0xff]
  %v48 = vld [vmem:[#allocation2 + $0x58] sm:$0xff]
  %v49 = vld [vmem:[#allocation2 + $0x60] sm:$0xff]
  %v50 = vld [vmem:[#allocation2 + $0x68] sm:$0xff]
  %v51 = vld [vmem:[#allocation2 + $0x70] sm:$0xff]
  %v52 = vld [vmem:[#allocation2 + $0x78] sm:$0xff]
  %53 = vmatprep.subr.mxu0 0.0
  %54 = vmatpush1.msra.mxu0 %v37
  %55 = vmatprep.subr.mxu0 0.0
  %56 = vmatpush1.msra.mxu0 %v38
  %57 = vmatprep.subr.mxu0 0.0
  %58 = vmatpush1.msra.mxu0 %v39
  %59 = vmatprep.subr.mxu0 0.0
  %60 = vmatpush1.msra.mxu0 %v40
  %61 = vmatprep.subr.mxu0 0.0
  %62 = vmatpush1.msra.mxu0 %v41
  %63 = vmatprep.subr.mxu0 0.0
  %64 = vmatpush1.msra.mxu0 %v42
  %65 = vmatprep.subr.mxu0 0.0
  %66 = vmatpush1.msra.mxu0 %v43
  %67 = vmatprep.subr.mxu0 0.0
  %68 = vmatpush1.msra.mxu0 %v44
  %69 = vmatprep.subr.mxu0 0.0
  %70 = vmatpush1.msra.mxu0 %v45
  %71 = vmatprep.subr.mxu0 0.0
  %72 = vmatpush1.msra.mxu0 %v46
  %73 = vmatprep.subr.mxu0 0.0
  %74 = vmatpush1.msra.mxu0 %v47
  %75 = vmatprep.subr.mxu0 0.0
  %76 = vmatpush1.msra.mxu0 %v48
  %77 = vmatprep.subr.mxu0 0.0
  %78 = vmatpush1.msra.mxu0 %v49
  %79 = vmatprep.subr.mxu0 0.0
  %80 = vmatpush1.msra.mxu0 %v50
  %81 = vmatprep.subr.mxu0 0.0
  %82 = vmatpush1.msra.mxu0 %v51
  %83 = vmatprep.subr.mxu0 0.0
  %84 = vmatpush1.msra.mxu0 %v52
  %85 = vmatprep.subr.mxu0 0.0
  %86 = vmatpush1.msra.mxu0 0.0
  %87 = vmatprep.subr.mxu0 0.0
  %88 = vmatpush1.msra.mxu0 0.0
  %89 = vmatprep.subr.mxu0 0.0
  %90 = vmatpush1.msra.mxu0 0.0
  %91 = vmatprep.subr.mxu0 0.0
  %92 = vmatpush1.msra.mxu0 0.0
  %93 = vmatprep.subr.mxu0 0.0
  %94 = vmatpush1.msra.mxu0 0.0
  %95 = vmatprep.subr.mxu0 0.0
  %96 = vmatpush1.msra.mxu0 0.0
  %97 = vmatprep.subr.mxu0 0.0
  %98 = vmatpush1.msra.mxu0 0.0
  %99 = vmatprep.subr.mxu0 0.0
  %100 = vmatpush1.msra.mxu0 0.0
  %101 = vmatprep.subr.mxu0 0.0
  %102 = vmatpush1.msra.mxu0 0.0
  %103 = vmatprep.subr.mxu0 0.0
  %104 = vmatpush1.msra.mxu0 0.0
  %105 = vmatprep.subr.mxu0 0.0
  %106 = vmatpush1.msra.mxu0 0.0
  %107 = vmatprep.subr.mxu0 0.0
  %108 = vmatpush1.msra.mxu0 0.0
  %109 = vmatprep.subr.mxu0 0.0
  %110 = vmatpush1.msra.mxu0 0.0
  %111 = vmatprep.subr.mxu0 0.0
  %112 = vmatpush1.msra.mxu0 0.0
  %113 = vmatprep.subr.mxu0 0.0
  %114 = vmatpush1.msra.mxu0 0.0
  %115 = vmatprep.subr.mxu0 0.0
  %116 = vmatpush1.msra.mxu0 0.0
  %117 = vmatprep.mubr.f32.mxu0 0.0
  %118 = vmatmul.mubr.f32.gmra.mrb[0].mxu0 %v18
  %v119 = vpop.f32.mrb[0].mxu0
  %v120 = vadd.f32 0.0, %v119
  %v121 = vpop.f32.mrb[0].mxu0
  %122 = vdwg.mxu0
  %v123 = vadd.f32 %v120, %v18
  %124 = vst [vmem:[#allocation2] sm:$0xff] %v123
  %v125 = vld [vmem:[#allocation2] sm:$0xff]
  %v126 = vld [vmem:[#allocation2 + $0x8] sm:$0xff]
  %v127 = vld [vmem:[#allocation2 + $0x10] sm:$0xff]
  %v128 = vld [vmem:[#allocation2 + $0x18] sm:$0xff]
  %v129 = vld [vmem:[#allocation2 + $0x20] sm:$0xff]
  %v130 = vld [vmem:[#allocation2 + $0x28] sm:$0xff]
  %v131 = vld [vmem:[#allocation2 + $0x30] sm:$0xff]
  %v132 = vld [vmem:[#allocation2 + $0x38] sm:$0xff]
  %v133 = vld [vmem:[#allocation2 + $0x40] sm:$0xff]
  %v134 = vld [vmem:[#allocation2 + $0x48] sm:$0xff]
  %v135 = vld [vmem:[#allocation2 + $0x50] sm:$0xff]
  %v136 = vld [vmem:[#allocation2 + $0x58] sm:$0xff]
  %v137 = vld [vmem:[#allocation2 + $0x60] sm:$0xff]
  %v138 = vld [vmem:[#allocation2 + $0x68] sm:$0xff]
  %v139 = vld [vmem:[#allocation2 + $0x70] sm:$0xff]
  %v140 = vld [vmem:[#allocation2 + $0x78] sm:$0xff]
  %141 = vmatprep.subr.mxu0 0.0
  %142 = vmatpush1.msra.mxu0 %v125
  %143 = vmatprep.subr.mxu0 0.0
  %144 = vmatpush1.msra.mxu0 %v126
  %145 = vmatprep.subr.mxu0 0.0
  %146 = vmatpush1.msra.mxu0 %v127
  %147 = vmatprep.subr.mxu0 0.0
  %148 = vmatpush1.msra.mxu0 %v128
  %149 = vmatprep.subr.mxu0 0.0
  %150 = vmatpush1.msra.mxu0 %v129
  %151 = vmatprep.subr.mxu0 0.0
  %152 = vmatpush1.msra.mxu0 %v130
  %153 = vmatprep.subr.mxu0 0.0
  %154 = vmatpush1.msra.mxu0 %v131
  %155 = vmatprep.subr.mxu0 0.0
  %156 = vmatpush1.msra.mxu0 %v132
  %157 = vmatprep.subr.mxu0 0.0
  %158 = vmatpush1.msra.mxu0 %v133
  %159 = vmatprep.subr.mxu0 0.0
  %160 = vmatpush1.msra.mxu0 %v134
  %161 = vmatprep.subr.mxu0 0.0
  %162 = vmatpush1.msra.mxu0 %v135
  %163 = vmatprep.subr.mxu0 0.0
  %164 = vmatpush1.msra.mxu0 %v136
  %165 = vmatprep.subr.mxu0 0.0
  %166 = vmatpush1.msra.mxu0 %v137
  %167 = vmatprep.subr.mxu0 0.0
  %168 = vmatpush1.msra.mxu0 %v138
  %169 = vmatprep.subr.mxu0 0.0
  %170 = vmatpush1.msra.mxu0 %v139
  %171 = vmatprep.subr.mxu0 0.0
  %172 = vmatpush1.msra.mxu0 %v140
  %173 = vmatprep.subr.mxu0 0.0
  %174 = vmatpush1.msra.mxu0 0.0
  %175 = vmatprep.subr.mxu0 0.0
  %176 = vmatpush1.msra.mxu0 0.0
  %177 = vmatprep.subr.mxu0 0.0
  %178 = vmatpush1.msra.mxu0 0.0
  %179 = vmatprep.subr.mxu0 0.0
  %180 = vmatpush1.msra.mxu0 0.0
  %181 = vmatprep.subr.mxu0 0.0
  %182 = vmatpush1.msra.mxu0 0.0
  %183 = vmatprep.subr.mxu0 0.0
  %184 = vmatpush1.msra.mxu0 0.0
  %185 = vmatprep.subr.mxu0 0.0
  %186 = vmatpush1.msra.mxu0 0.0
  %187 = vmatprep.subr.mxu0 0.0
  %188 = vmatpush1.msra.mxu0 0.0
  %189 = vmatprep.subr.mxu0 0.0
  %190 = vmatpush1.msra.mxu0 0.0
  %191 = vmatprep.subr.mxu0 0.0
  %192 = vmatpush1.msra.mxu0 0.0
  %193 = vmatprep.subr.mxu0 0.0
  %194 = vmatpush1.msra.mxu0 0.0
  %195 = vmatprep.subr.mxu0 0.0
  %196 = vmatpush1.msra.mxu0 0.0
  %197 = vmatprep.subr.mxu0 0.0
  %198 = vmatpush1.msra.mxu0 0.0
  %199 = vmatprep.subr.mxu0 0.0
  %200 = vmatpush1.msra.mxu0 0.0
  %201 = vmatprep.subr.mxu0 0.0
  %202 = vmatpush1.msra.mxu0 0.0
  %203 = vmatprep.subr.mxu0 0.0
  %204 = vmatpush1.msra.mxu0 0.0
  %205 = vmatprep.mubr.f32.mxu0 0.0
  %206 = vmatmul.mubr.f32.gmra.mrb[0].mxu0 %v123
  %v207 = vpop.f32.mrb[0].mxu0
  %v208 = vadd.f32 0.0, %v207
  %v209 = vpop.f32.mrb[0].mxu0
  %210 = vdwg.mxu0
  %v211 = vlaneseq
  %v212 = vand.u32 %v211, 127
  %s213 = sld [smem:[#allocation4]]
  %p214 = scmp.gt.f32.partialorder %s213, 0.35
  %vm215 = vcmp.eq.s32.totalorder %v212, 0
  %v216 = vsel %vm215, %v208, 0.0
  %vm217 = vcmask 1040384
  %v218 = vsel %vm217, %v216, 0.0
  %219 = vadd.xlane.f32.xlu0 %v218
  %v220 = vpop.xlane.xlu0 %219
  %s221 = scalar_select %p214, 1, 0
  %v222 = vstv %s221
  %vm223 = vcmp.eq.s32.totalorder %v222, 1
  %vm224 = vmand %vm215, %vm223
  %v225 = vsel %vm224, %v220, 0.0
  %s226 = sld [smem:[#allocation4 + $0x1]]
  %p227 = scmp.gt.f32.partialorder %s226, 0.35
  %vm228 = vcmp.eq.s32.totalorder %v212, 1
  %v229 = vsel %vm228, %v208, 0.0
  %v230 = vsel %vm217, %v229, 0.0
  %231 = vadd.xlane.f32.xlu0 %v230
  %v232 = vpop.xlane.xlu0 %231
  %vm233 = vcmp.eq.s32.totalorder %v212, %v222
  %s234 = scalar_select %p227, 1, 0
  %v235 = vstv %s234
  %vm236 = vcmp.eq.s32.totalorder %v235, 1
  %vm237 = vmand %vm233, %vm236
  %v238 = vsel %vm237, %v232, %v225
  %s239 = sadd.s32 %s221, %s234
  %s240 = sld [smem:[#allocation4 + $0x2]]
  %p241 = scmp.gt.f32.partialorder %s240, 0.35
  %vm242 = vcmp.eq.s32.totalorder %v212, 2
  %v243 = vsel %vm242, %v208, 0.0
  %v244 = vsel %vm217, %v243, 0.0
  %245 = vadd.xlane.f32.xlu0 %v244
  %v246 = vpop.xlane.xlu0 %245
  %v247 = vstv %s239
  %vm248 = vcmp.eq.s32.totalorder %v212, %v247
  %s249 = scalar_select %p241, 1, 0
  %v250 = vstv %s249
  %vm251 = vcmp.eq.s32.totalorder %v250, 1
  %vm252 = vmand %vm248, %vm251
  %v253 = vsel %vm252, %v246, %v238
  %s254 = sadd.s32 %s239, %s249
  %s255 = sld [smem:[#allocation4 + $0x3]]
  %p256 = scmp.gt.f32.partialorder %s255, 0.35
  %vm257 = vcmask 1041409
  %v258 = vsel %vm257, %v216, 0.0
  %259 = vadd.xlane.f32.xlu0 %v258
  %v260 = vpop.xlane.xlu0 %259
  %v261 = vstv %s254
  %vm262 = vcmp.eq.s32.totalorder %v212, %v261
  %s263 = scalar_select %p256, 1, 0
  %v264 = vstv %s263
  %vm265 = vcmp.eq.s32.totalorder %v264, 1
  %vm266 = vmand %vm262, %vm265
  %v268 = vrot.slane %v253, 7
  %v270 = vsel %vm266, %v260, %v268
  %s271 = sadd.s32 %s254, %s263
  %s272 = sld [smem:[#allocation4 + $0x4]]
  %p273 = scmp.gt.f32.partialorder %s272, 0.35
  %v274 = vsel %vm257, %v229, 0.0
  %275 = vadd.xlane.f32.xlu0 %v274
  %v276 = vpop.xlane.xlu0 %275
  %v277 = vstv %s271
  %vm278 = vcmp.eq.s32.totalorder %v212, %v277
  %s279 = scalar_select %p273, 1, 0
  %v280 = vstv %s279
  %vm281 = vcmp.eq.s32.totalorder %v280, 1
  %vm282 = vmand %vm278, %vm281
  %v283 = vsel %vm282, %v276, %v270
  %s284 = sadd.s32 %s271, %s279
  %s285 = sld [smem:[#allocation4 + $0x5]]
  %p286 = scmp.gt.f32.partialorder %s285, 0.35
  %v287 = vsel %vm257, %v243, 0.0
  %288 = vadd.xlane.f32.xlu0 %v287
  %v289 = vpop.xlane.xlu0 %288
  %v290 = vstv %s284
  %vm291 = vcmp.eq.s32.totalorder %v212, %v290
  %s292 = scalar_select %p286, 1, 0
  %v293 = vstv %s292
  %vm294 = vcmp.eq.s32.totalorder %v293, 1
  %vm295 = vmand %vm291, %vm294
  %v296 = vsel %vm295, %v289, %v283
  %s297 = sadd.s32 %s284, %s292
  %s298 = sld [smem:[#allocation4 + $0x6]]
  %p299 = scmp.gt.f32.partialorder %s298, 0.35
  %vm300 = vcmask 1042434
  %v301 = vsel %vm300, %v216, 0.0
  %302 = vadd.xlane.f32.xlu0 %v301
  %v303 = vpop.xlane.xlu0 %302
  %v304 = vstv %s297
  %vm305 = vcmp.eq.s32.totalorder %v212, %v304
  %s306 = scalar_select %p299, 1, 0
  %v307 = vstv %s306
  %vm308 = vcmp.eq.s32.totalorder %v307, 1
  %vm309 = vmand %vm305, %vm308
  %v311 = vrot.slane %v296, 7
  %v313 = vsel %vm309, %v303, %v311
  %s314 = sadd.s32 %s297, %s306
  %s315 = sld [smem:[#allocation4 + $0x7]]
  %p316 = scmp.gt.f32.partialorder %s315, 0.35
  %v317 = vsel %vm300, %v229, 0.0
  %318 = vadd.xlane.f32.xlu0 %v317
  %v319 = vpop.xlane.xlu0 %318
  %v320 = vstv %s314
  %vm321 = vcmp.eq.s32.totalorder %v212, %v320
  %s322 = scalar_select %p316, 1, 0
  %v323 = vstv %s322
  %vm324 = vcmp.eq.s32.totalorder %v323, 1
  %vm325 = vmand %vm321, %vm324
  %v326 = vsel %vm325, %v319, %v313
  %s327 = sadd.s32 %s314, %s322
  %s328 = sld [smem:[#allocation4 + $0x8]]
  %p329 = scmp.gt.f32.partialorder %s328, 0.35
  %v330 = vsel %vm300, %v243, 0.0
  %331 = vadd.xlane.f32.xlu0 %v330
  %v332 = vpop.xlane.xlu0 %331
  %v333 = vstv %s327
  %vm334 = vcmp.eq.s32.totalorder %v212, %v333
  %s335 = scalar_select %p329, 1, 0
  %v336 = vstv %s335
  %vm337 = vcmp.eq.s32.totalorder %v336, 1
  %vm338 = vmand %vm334, %vm337
  %v339 = vsel %vm338, %v332, %v326
  %v340 = vlaneseq
  %v341 = vshrl.u32 %v340, 7
  %v342 = vsub.s32 2, %v341
  %v343 = vrot.slane %v339, %v342
  %v344 = vadd.f32 %v120, %v343
  %345 = vst [vmem:[%s3] sm:$0xff] %v344
  // Predicated region
  $region10: #{_model_forward_impl.1} parent=0 // pred_check
    _
  $region11: #{_model_forward_impl.1} parent=0 // pred_check_branch
    %347 = sbr.rel (0) target = $region13
  $region12: #{_model_forward_impl.1} parent=0 // pred_region
    _
  $region13: #{_model_forward_impl.1} parent=0 // pred_fallthru
    _
  // Predicated region
  $region14: #{_model_forward_impl.1} parent=0 // pred_check
    _
  $region15: #{_model_forward_impl.1} parent=0 // pred_check_branch
    %349 = sbr.rel (0) target = $region17
  $region16: #{_model_forward_impl.1} parent=0 // pred_region
    _
  $region17: #{_model_forward_impl.1} parent=0 // pred_fallthru
    _

</llo_original>
